<compile_context>
chip_gen: v6e
topology: v6e:2x2x1
jax: 0.10.0
libtpu: 0.0.40
codegen_flags: <defaults>
</compile_context>

<pallas_src>
import functools

import numpy as np
import jax
import jax.numpy as jnp
from jax.experimental import pallas as pl
from jax.experimental.pallas import tpu as pltpu

# ----------------------------- model config -----------------------------
B = 2              # batch
L = 16             # sequence length
V = 100            # vocab size (emb_num)
D = 32             # emb_dim
CO = 8             # kernel_num
KS = (3, 4, 5)     # kernel_sizes
NCH = len(KS) * CO     # real packed conv output channels (24)
NCHP = 128         # lane-padded conv channels (one full lane tile)
KMAX = max(KS)
HID = 500          # fc1 hidden size (hard-coded to 500 in the PyTorch module)
C = 4              # output_size


def _cnn_kernel(tok_ref, table_ref, convp_ref, fcp_ref, out_ref, embp_ref,
                *, bl, vocab, emb_dim, kmax, nch, nch_pad, seq_len):
    f32 = jnp.float32

    # (1) Fused embedding lookup: one-hot (B*L, V) @ (V, D) on the MXU.
    # TODO(synk): for a realistic vocab size, keep the table in HBM
    # (memory_space=pl.ANY) and DMA-gather only the B*L rows actually needed.
    tok = tok_ref[...]                                                # (bl, 1) i32
    vocab_iota = jax.lax.broadcasted_iota(jnp.int32, (bl, vocab), 1)
    onehot = (vocab_iota == tok).astype(f32)                          # (bl, V)
    emb = jnp.dot(onehot, table_ref[...], preferred_element_type=f32)  # (bl, D)

    # (2) Zero-extended scratch so shifted taps can read past the last row.
    embp_ref[0:bl, :] = emb
    embp_ref[bl:, :] = jnp.zeros((embp_ref.shape[0] - bl, emb_dim), f32)

    # (3) Convolution = sum of KMAX shifted matmuls against per-tap weight
    # blocks (rows [k*D, (k+1)*D) of convp, lane-padded to 128 channels).
    # NOTE: for time position t, tap k reads row t+k; past the end of the
    # sequence that row is either the next batch's row or the zero pad.  This
    # is only correct because those positions are zeroed by t_mask AFTER the
    # ReLU (all values >= 0), making the max-pool insensitive to them.  Any
    # change to the activation or the pooling would silently break this.
    conv = jnp.dot(emb, convp_ref[0:emb_dim, :], preferred_element_type=f32)
    for k in range(1, kmax):
        conv = conv + jnp.dot(embp_ref[k:k + bl, :],
                              convp_ref[k * emb_dim:(k + 1) * emb_dim, :],
                              preferred_element_type=f32)             # (bl, 128)

    kd = kmax * emb_dim
    b_row = convp_ref[kd:kd + 1, :]                                   # (1, 128)
    t_mask = convp_ref[kd + 8:kd + 8 + bl, :]                         # (bl, 128)
    conv = jnp.maximum(conv + b_row, 0.0) * t_mask

    # (4) Max-pool over time per batch row; branch outputs are contiguous on
    # the (lane-padded) channel axis, so there is no feature concat.
    nb = bl // seq_len
    feats = jnp.concatenate(
        [jnp.max(conv[b * seq_len:(b + 1) * seq_len, :], axis=0, keepdims=True)
         for b in range(nb)], axis=0)                                 # (B, 128)

    # (5) Folded fc1@fc2 as ONE trans_b dot.  Lane `nch` of feats is set to a
    # constant 1 so the folded bias (stored in column `nch` of the transposed
    # weight) is applied by the same matmul.
    lane = jax.lax.broadcasted_iota(jnp.int32, (nb, nch_pad), 1)
    feats = jnp.where(lane == nch, 1.0, feats)
    wt = fcp_ref[...]                                                 # (8, 128)
    logits = jax.lax.dot_general(
        feats, wt, (((1,), (1,)), ((), ())),
        preferred_element_type=f32)                                   # (B, 8)

    # (6) Lane-dense (8, 128) output block; real logits live at [:B, :C].
    out_ref[...] = jnp.zeros_like(out_ref)
    out_ref[0:nb, 0:fcp_ref.shape[0]] = logits


def cnn_n_forward(tokens, params):
    """tokens: (B, L) int32 -> logits (B, C) float32."""
    assert B <= 8 and C <= 8
    tok2d = tokens.reshape(B * L, 1).astype(jnp.int32)
    kernel = functools.partial(
        _cnn_kernel, bl=B * L, vocab=V, emb_dim=D, kmax=KMAX,
        nch=NCH, nch_pad=NCHP, seq_len=L)
    vmem = pl.BlockSpec(memory_space=pltpu.MemorySpace.VMEM)
    out_pad = pl.pallas_call(
        kernel,
        out_shape=jax.ShapeDtypeStruct((8, 128), jnp.float32),
        in_specs=[vmem] * 4,
        out_specs=vmem,
        scratch_shapes=[pltpu.VMEM((B * L + 8, D), jnp.float32)],
    )(tok2d, params["emb"], params["convp"], params["fcp"])
    return out_pad[:B, :C]


def init_params(key):
    keys = jax.random.split(key, 11)
    p = {}
    p["emb"] = jax.random.normal(keys[0], (V, D), jnp.float32) * 0.1
    # conv weights stored as (K, D, Co)  (torch layout is (Co, 1, K, D))
    for i, k in enumerate(KS):
        p[f"w{k}"] = jax.random.normal(keys[1 + i], (k, D, CO), jnp.float32) * 0.1
        p[f"b{k}"] = jax.random.normal(keys[4 + i], (1, CO), jnp.float32) * 0.1
    # fc weights stored as (in, out)  (torch layout is (out, in))
    p["fc1_w"] = jax.random.normal(keys[7], (NCH, HID), jnp.float32) * 0.1
    p["fc1_b"] = jax.random.normal(keys[8], (1, HID), jnp.float32) * 0.1
    p["fc2_w"] = jax.random.normal(keys[9], (HID, C), jnp.float32) * 0.1
    p["fc2_b"] = jax.random.normal(keys[10], (1, C), jnp.float32) * 0.1

    # ---- one-time packing into coalesced, lane-dense kernel buffers ----
    # Alignment assumptions for the fixed row offsets inside convp:
    assert D % 8 == 0 and L % 8 == 0 and (B * L) % 8 == 0
    assert (KMAX * D) % 8 == 0
    assert NCH < NCHP and C <= 8

    kd = KMAX * D
    convp = np.zeros((kd + 8 + B * L, NCHP), np.float32)
    for j, k in enumerate(KS):
        w = np.asarray(p[f"w{k}"])                    # (k, D, CO)
        for kk in range(k):                           # per-tap weight blocks
            convp[kk * D:(kk + 1) * D, j * CO:(j + 1) * CO] = w[kk]
        convp[kd, j * CO:(j + 1) * CO] = np.asarray(p[f"b{k}"])[0]   # bias row
        for b in range(B):                            # time-validity mask
            convp[kd + 8 + b * L: kd + 8 + b * L + (L - k + 1),
                  j * CO:(j + 1) * CO] = 1.0
    p["convp"] = jnp.asarray(convp)

    # Folded classifier: W = fc1_w @ fc2_w, b = fc1_b @ fc2_w + fc2_b
    # (exact fold done on host in float64, shipped transposed + lane-dense).
    fc1_w = np.asarray(p["fc1_w"], np.float64)
    fc1_b = np.asarray(p["fc1_b"], np.float64)
    fc2_w = np.asarray(p["fc2_w"], np.float64)
    fc2_b = np.asarray(p["fc2_b"], np.float64)
    w_fold = (fc1_w @ fc2_w).astype(np.float32)       # (NCH, C)
    b_fold = (fc1_b @ fc2_w + fc2_b).astype(np.float32)  # (1, C)
    fcp = np.zeros((8, NCHP), np.float32)
    fcp[:C, :NCH] = w_fold.T                          # transposed weight
    fcp[:C, NCH] = b_fold[0]                          # bias in the constant-1 lane
    p["fcp"] = jnp.asarray(fcp)
    return p


def reference_forward(tokens, p):
    """Pure-JAX reference mirroring the PyTorch forward (per-branch convs)."""
    hp = jax.lax.Precision.HIGHEST
    emb = jnp.take(p["emb"], tokens, axis=0)                      # (B, L, D)
    feats = []
    for k in KS:
        t = L - k + 1
        acc = jnp.zeros((B, t, CO), jnp.float32)
        for kk in range(k):
            acc = acc + jnp.einsum("btd,dc->btc", emb[:, kk:kk + t, :],
                                   p[f"w{k}"][kk], precision=hp)
        acc = jax.nn.relu(acc + p[f"b{k}"][None, :, :])
        feats.append(jnp.max(acc, axis=1))
    x = jnp.concatenate(feats, axis=1)
    h = jnp.dot(x, p["fc1_w"], precision=hp) + p["fc1_b"]
    return jnp.dot(h, p["fc2_w"], precision=hp) + p["fc2_b"]


if __name__ == "__main__":
    key = jax.random.PRNGKey(0)
    k_tok, k_par = jax.random.split(key)
    tokens = jax.random.randint(k_tok, (B, L), 0, V, dtype=jnp.int32)
    params = init_params(k_par)

    out = jax.jit(cnn_n_forward)(tokens, params)
    out = jax.block_until_ready(out)

    ref = reference_forward(tokens, params)
    assert out.shape == (B, C)
    # tolerance covers MXU f32 multi-pass vs. XLA matmul precision differences
    assert jnp.allclose(out, ref, atol=5e-4, rtol=5e-4), (
        f"max abs diff = {jnp.max(jnp.abs(out - ref))}")
    print("KERNEL_OK")
</pallas_src>

<mosaic_0001>
module attributes {stable_mosaic.version = 11 : i64} {
  func.func @_cnn_kernel(%arg0: memref<32x1xi32, #tpu.memory_space<vmem>>, %arg1: memref<100x32xf32, #tpu.memory_space<vmem>>, %arg2: memref<200x128xf32, #tpu.memory_space<vmem>>, %arg3: memref<8x128xf32, #tpu.memory_space<vmem>>, %arg4: memref<8x128xf32, #tpu.memory_space<vmem>>, %arg5: memref<40x32xf32, #tpu.memory_space<vmem>>) attributes {dimension_semantics = [], scalar_prefetch = 0 : i64, scratch_operands = 1 : i64, tpu.core_type = #tpu.core_type<tc>} {
    %c0 = arith.constant 0 : index
    %c0_0 = arith.constant 0 : index
    %0 = vector.load %arg0[%c0, %c0_0] : memref<32x1xi32, #tpu.memory_space<vmem>>, vector<32x1xi32>
    %1 = tpu.iota {dimensions = array<i32: 1>} : vector<32x100xi32>
    %2 = vector.broadcast %0 : vector<32x1xi32> to vector<32x100xi32>
    %3 = arith.cmpi eq, %1, %2 : vector<32x100xi32>
    %4 = arith.extui %3 : vector<32x100xi1> to vector<32x100xi32>
    %5 = arith.sitofp %4 : vector<32x100xi32> to vector<32x100xf32>
    %c0_1 = arith.constant 0 : index
    %c0_2 = arith.constant 0 : index
    %6 = vector.load %arg1[%c0_1, %c0_2] : memref<100x32xf32, #tpu.memory_space<vmem>>, vector<100x32xf32>
    %cst = arith.constant dense<0.000000e+00> : vector<32x32xf32>
    %7 = tpu.matmul %5, %6, %cst {dimension_numbers = #tpu.dot_dimension_numbers<[1], [0], [0], [1], [0, 0, 1, 1], [], []>} : vector<32x100xf32>, vector<100x32xf32>, vector<32x32xf32> -> vector<32x32xf32>
    %c0_3 = arith.constant 0 : index
    %c0_4 = arith.constant 0 : index
    %8 = vector.load %arg5[%c0_3, %c0_4] : memref<40x32xf32, #tpu.memory_space<vmem>>, vector<32x32xf32>
    tpu.vector_store %arg5[%c0_3, %c0_4], %7 {strides = array<i32>} : memref<40x32xf32, #tpu.memory_space<vmem>>, vector<32x32xf32>,
    %cst_5 = arith.constant 0.000000e+00 : f32
    %9 = vector.broadcast %cst_5 : f32 to vector<8x32xf32>
    %c32 = arith.constant 32 : index
    %c0_6 = arith.constant 0 : index
    %10 = vector.load %arg5[%c32, %c0_6] : memref<40x32xf32, #tpu.memory_space<vmem>>, vector<8x32xf32>
    tpu.vector_store %arg5[%c32, %c0_6], %9 {strides = array<i32>} : memref<40x32xf32, #tpu.memory_space<vmem>>, vector<8x32xf32>,
    %c0_7 = arith.constant 0 : index
    %c0_8 = arith.constant 0 : index
    %11 = vector.load %arg2[%c0_7, %c0_8] : memref<200x128xf32, #tpu.memory_space<vmem>>, vector<32x128xf32>
    %cst_9 = arith.constant dense<0.000000e+00> : vector<32x128xf32>
    %12 = tpu.matmul %7, %11, %cst_9 {dimension_numbers = #tpu.dot_dimension_numbers<[1], [0], [0], [1], [0, 0, 1, 1], [], []>} : vector<32x32xf32>, vector<32x128xf32>, vector<32x128xf32> -> vector<32x128xf32>
    %c1 = arith.constant 1 : index
    %c0_10 = arith.constant 0 : index
    %13 = vector.load %arg5[%c1, %c0_10] : memref<40x32xf32, #tpu.memory_space<vmem>>, vector<32x32xf32>
    %c32_11 = arith.constant 32 : index
    %c0_12 = arith.constant 0 : index
    %14 = vector.load %arg2[%c32_11, %c0_12] : memref<200x128xf32, #tpu.memory_space<vmem>>, vector<32x128xf32>
    %cst_13 = arith.constant dense<0.000000e+00> : vector<32x128xf32>
    %15 = tpu.matmul %13, %14, %cst_13 {dimension_numbers = #tpu.dot_dimension_numbers<[1], [0], [0], [1], [0, 0, 1, 1], [], []>} : vector<32x32xf32>, vector<32x128xf32>, vector<32x128xf32> -> vector<32x128xf32>
    %16 = arith.addf %12, %15 : vector<32x128xf32>
    %c2 = arith.constant 2 : index
    %c0_14 = arith.constant 0 : index
    %17 = vector.load %arg5[%c2, %c0_14] : memref<40x32xf32, #tpu.memory_space<vmem>>, vector<32x32xf32>
    %c64 = arith.constant 64 : index
    %c0_15 = arith.constant 0 : index
    %18 = vector.load %arg2[%c64, %c0_15] : memref<200x128xf32, #tpu.memory_space<vmem>>, vector<32x128xf32>
    %cst_16 = arith.constant dense<0.000000e+00> : vector<32x128xf32>
    %19 = tpu.matmul %17, %18, %cst_16 {dimension_numbers = #tpu.dot_dimension_numbers<[1], [0], [0], [1], [0, 0, 1, 1], [], []>} : vector<32x32xf32>, vector<32x128xf32>, vector<32x128xf32> -> vector<32x128xf32>
    %20 = arith.addf %16, %19 : vector<32x128xf32>
    %c3 = arith.constant 3 : index
    %c0_17 = arith.constant 0 : index
    %21 = vector.load %arg5[%c3, %c0_17] : memref<40x32xf32, #tpu.memory_space<vmem>>, vector<32x32xf32>
    %c96 = arith.constant 96 : index
    %c0_18 = arith.constant 0 : index
    %22 = vector.load %arg2[%c96, %c0_18] : memref<200x128xf32, #tpu.memory_space<vmem>>, vector<32x128xf32>
    %cst_19 = arith.constant dense<0.000000e+00> : vector<32x128xf32>
    %23 = tpu.matmul %21, %22, %cst_19 {dimension_numbers = #tpu.dot_dimension_numbers<[1], [0], [0], [1], [0, 0, 1, 1], [], []>} : vector<32x32xf32>, vector<32x128xf32>, vector<32x128xf32> -> vector<32x128xf32>
    %24 = arith.addf %20, %23 : vector<32x128xf32>
    %c4 = arith.constant 4 : index
    %c0_20 = arith.constant 0 : index
    %25 = vector.load %arg5[%c4, %c0_20] : memref<40x32xf32, #tpu.memory_space<vmem>>, vector<32x32xf32>
    %c128 = arith.constant 128 : index
    %c0_21 = arith.constant 0 : index
    %26 = vector.load %arg2[%c128, %c0_21] : memref<200x128xf32, #tpu.memory_space<vmem>>, vector<32x128xf32>
    %cst_22 = arith.constant dense<0.000000e+00> : vector<32x128xf32>
    %27 = tpu.matmul %25, %26, %cst_22 {dimension_numbers = #tpu.dot_dimension_numbers<[1], [0], [0], [1], [0, 0, 1, 1], [], []>} : vector<32x32xf32>, vector<32x128xf32>, vector<32x128xf32> -> vector<32x128xf32>
    %28 = arith.addf %24, %27 : vector<32x128xf32>
    %c160 = arith.constant 160 : index
    %c0_23 = arith.constant 0 : index
    %29 = vector.load %arg2[%c160, %c0_23] : memref<200x128xf32, #tpu.memory_space<vmem>>, vector<1x128xf32>
    %c168 = arith.constant 168 : index
    %c0_24 = arith.constant 0 : index
    %30 = vector.load %arg2[%c168, %c0_24] : memref<200x128xf32, #tpu.memory_space<vmem>>, vector<32x128xf32>
    %31 = vector.broadcast %29 : vector<1x128xf32> to vector<32x128xf32>
    %32 = arith.addf %28, %31 : vector<32x128xf32>
    %cst_25 = arith.constant 0.000000e+00 : f32
    %33 = vector.broadcast %cst_25 : f32 to vector<32x128xf32>
    %34 = arith.maximumf %32, %33 : vector<32x128xf32>
    %35 = arith.mulf %34, %30 : vector<32x128xf32>
    %36 = vector.extract_strided_slice %35 {offsets = [0, 0], sizes = [16, 128], strides = [1, 1]} : vector<32x128xf32> to vector<16x128xf32>
    %cst_26 = arith.constant dense<0xFF800000> : vector<128xf32>
    %37 = vector.multi_reduction <maximumf>, %36, %cst_26 [0] : vector<16x128xf32> to vector<128xf32>
    %38 = vector.shape_cast %37 : vector<128xf32> to vector<1x128xf32>
    %39 = vector.extract_strided_slice %35 {offsets = [16, 0], sizes = [16, 128], strides = [1, 1]} : vector<32x128xf32> to vector<16x128xf32>
    %cst_27 = arith.constant dense<0xFF800000> : vector<128xf32>
    %40 = vector.multi_reduction <maximumf>, %39, %cst_27 [0] : vector<16x128xf32> to vector<128xf32>
    %41 = vector.shape_cast %40 : vector<128xf32> to vector<1x128xf32>
    %42 = tpu.concatenate %38, %41 in 0 : vector<1x128xf32>, vector<1x128xf32> -> vector<2x128xf32>
    %43 = tpu.iota {dimensions = array<i32: 1>} : vector<2x128xi32>
    %c24_i32 = arith.constant 24 : i32
    %44 = vector.broadcast %c24_i32 : i32 to vector<2x128xi32>
    %45 = arith.cmpi eq, %43, %44 : vector<2x128xi32>
    %cst_28 = arith.constant 1.000000e+00 : f32
    %46 = vector.broadcast %cst_28 : f32 to vector<2x128xf32>
    %47 = arith.select %45, %46, %42 : vector<2x128xi1>, vector<2x128xf32>
    %c0_29 = arith.constant 0 : index
    %c0_30 = arith.constant 0 : index
    %48 = vector.load %arg3[%c0_29, %c0_30] : memref<8x128xf32, #tpu.memory_space<vmem>>, vector<8x128xf32>
    %cst_31 = arith.constant dense<0.000000e+00> : vector<2x8xf32>
    %49 = tpu.matmul %47, %48, %cst_31 {dimension_numbers = #tpu.dot_dimension_numbers<[1], [1], [0], [0], [0, 0, 1, 0], [], []>} : vector<2x128xf32>, vector<8x128xf32>, vector<2x8xf32> -> vector<2x8xf32>
    %cst_32 = arith.constant 0.000000e+00 : f32
    %50 = vector.broadcast %cst_32 : f32 to vector<8x128xf32>
    %c0_33 = arith.constant 0 : index
    %c0_34 = arith.constant 0 : index
    %51 = vector.load %arg4[%c0_33, %c0_34] : memref<8x128xf32, #tpu.memory_space<vmem>>, vector<8x128xf32>
    tpu.vector_store %arg4[%c0_33, %c0_34], %50 {strides = array<i32>} : memref<8x128xf32, #tpu.memory_space<vmem>>, vector<8x128xf32>,
    %c0_35 = arith.constant 0 : index
    %c0_36 = arith.constant 0 : index
    %52 = vector.load %arg4[%c0_35, %c0_36] : memref<8x128xf32, #tpu.memory_space<vmem>>, vector<2x8xf32>
    tpu.vector_store %arg4[%c0_35, %c0_36], %49 {strides = array<i32>} : memref<8x128xf32, #tpu.memory_space<vmem>>, vector<2x8xf32>,
    return
  }
}

</mosaic_0001>

<llo_original>
// kernel: cnn_n_forward.1
$region0: #{cnn_n_forward.1}
  #allocation0 [shape = 'u32[]', space=smem, size = 0x4, offset = 0x4, fixed_abs, tag = 'smem constant byte address 0x4 - core index']
  #allocation1 [shape = 'u32[144,128]{1,0:T(1,128)}', space=vmem, size = 0x12000, scoped, tag = 'internal scratch']
  #allocation2 [shape = 'f32[40,32]{1,0:T(8,128)}', space=vmem, size = 0x5000, scoped, tag = 'scratch operand']
  %s0 = inlined_call_operand.vmem [shape: s32[32,1], index: 0, kind: input, shape index: {}]
  %s1 = inlined_call_operand.vmem [shape: f32[100,32], index: 1, kind: input, shape index: {}]
  %s2 = inlined_call_operand.hbm [shape: f32[200,128], index: 2, kind: input, shape index: {}]
  %s3 = inlined_call_operand.vmem [shape: f32[8,128], index: 3, kind: input, shape index: {}]
  %s4 = inlined_call_operand.vmem [shape: f32[8,128], index: 4, kind: output, shape index: {}]
  %s5 = sld [smem:[#allocation0]]
  $region30: #{cnn_n_forward.1} parent=0
    _
  %s7 = ssub.s32 1, %s5
  %s8 = scalar_select 0, %s7, %s5
  $region1: #{cnn_n_forward.1} parent=0
    #allocation3 [shape = 'u8[102400]{0}', space=vmem, size = 0x19000, scoped, tag = 'input window, operand 2, single buffered']
    #allocation4 [shape = 's32[1]{0}', space=sflag, size = 0x4, scoped, tag = 'scoped memory for cnn_n_forward.1']
    %9 = vsyncpa [#allocation4], 0
    // Predicated region
    $region2: #{cnn_n_forward.1} parent=1 // pred_check
      _
    $region3: #{cnn_n_forward.1} parent=1 // pred_check_branch
      %11 = sbr.rel (0) target = $region5
    $region4: #{cnn_n_forward.1} parent=1 // pred_region
      _
    $region5: #{cnn_n_forward.1} parent=1 // pred_fallthru
      _
    // Predicated region
    $region6: #{cnn_n_forward.1} parent=1 // pred_check
      _
    $region7: #{cnn_n_forward.1} parent=1 // pred_check_branch
      %13 = sbr.rel (0) target = $region9
    $region8: #{cnn_n_forward.1} parent=1 // pred_region
      _
    $region9: #{cnn_n_forward.1} parent=1 // pred_fallthru
      _
    // Predicated region
    $region10: #{cnn_n_forward.1} parent=1 // pred_check
      _
    $region11: #{cnn_n_forward.1} parent=1 // pred_check_branch
      %15 = sbr.rel (0) target = $region13
    $region12: #{cnn_n_forward.1} parent=1 // pred_region
      %s17 = ssub.s32 3200, 3200
      %18 = vsyncadd [#allocation4], %s17
      %s19 = sshll.u32 [#allocation3], 4
      %s20 = int_to_ptr.vmem [resolvable:$true] %s19
      %25 = dma.hbm_to_vmem [thread:$0]  %s2, 3200, %s20, [#allocation4], 128, 128, 8
    $region13: #{cnn_n_forward.1} parent=1 // pred_fallthru
      _
    // Predicated region
    $region14: #{cnn_n_forward.1} parent=1 // pred_check
      _
    $region15: #{cnn_n_forward.1} parent=1 // pred_check_branch
      %27 = sbr.rel (0) target = $region17
    $region16: #{cnn_n_forward.1} parent=1 // pred_region
      _
    $region17: #{cnn_n_forward.1} parent=1 // pred_fallthru
      _
    // Predicated region
    $region18: #{cnn_n_forward.1} parent=1 // pred_check
      _
    $region19: #{cnn_n_forward.1} parent=1 // pred_check_branch
      %29 = sbr.rel (0) target = $region21
    $region20: #{cnn_n_forward.1} parent=1 // pred_region
      %30 = dma.done [#allocation4], 3200
    $region21: #{cnn_n_forward.1} parent=1 // pred_fallthru
      _
    %v31 = vld [vmem:[%s0] sm:$0xff]
    %v32 = vld [vmem:[%s0 + $0x8] sm:$0xff]
    %v33 = vld [vmem:[%s0 + $0x10] sm:$0xff]
    %v34 = vld [vmem:[%s0 + $0x18] sm:$0xff]
    %v35 = vlaneseq
    %v36 = vand.u32 %v35, 127
    %37 = vset.pattern.permute.xlu0 0
    %38 = vperm.xlu0 %37, %v31
    %v39 = vpop.permute.xlu0 %38
    %40 = vset.pattern.permute.xlu0 0
    %41 = vperm.xlu0 %40, %v32
    %v42 = vpop.permute.xlu0 %41
    %43 = vset.pattern.permute.xlu0 0
    %44 = vperm.xlu0 %43, %v33
    %v45 = vpop.permute.xlu0 %44
    %46 = vset.pattern.permute.xlu0 0
    %47 = vperm.xlu0 %46, %v34
    %v48 = vpop.permute.xlu0 %47
    %vm49 = vcmp.eq.s32.totalorder %v36, %v39
    %vm50 = vcmp.eq.s32.totalorder %v36, %v42
    %vm51 = vcmp.eq.s32.totalorder %v36, %v45
    %vm52 = vcmp.eq.s32.totalorder %v36, %v48
    %v53 = vsel %vm49, 1, 0
    %v54 = vsel %vm50, 1, 0
    %v55 = vsel %vm51, 1, 0
    %v56 = vsel %vm52, 1, 0
    %v57 = vcvt.s32.f32 %v53
    %v58 = vcvt.s32.f32 %v54
    %v59 = vcvt.s32.f32 %v55
    %v60 = vcvt.s32.f32 %v56
    %v61 = vld [vmem:[%s1] sm:$0xff]
    %v62 = vld [vmem:[%s1 + $0x8] sm:$0xff]
    %v63 = vld [vmem:[%s1 + $0x10] sm:$0xff]
    %v64 = vld [vmem:[%s1 + $0x18] sm:$0xff]
    %v65 = vld [vmem:[%s1 + $0x20] sm:$0xff]
    %v66 = vld [vmem:[%s1 + $0x28] sm:$0xff]
    %v67 = vld [vmem:[%s1 + $0x30] sm:$0xff]
    %v68 = vld [vmem:[%s1 + $0x38] sm:$0xff]
    %v69 = vld [vmem:[%s1 + $0x40] sm:$0xff]
    %v70 = vld [vmem:[%s1 + $0x48] sm:$0xff]
    %v71 = vld [vmem:[%s1 + $0x50] sm:$0xff]
    %v72 = vld [vmem:[%s1 + $0x58] sm:$0xff]
    %v73 = vld [vmem:[%s1 + $0x60] sm:$0xf]
    %vm74 = vcmask 818176
    %v76 = vsel %vm74, %v57, 0
    %v79 = vsel %vm74, %v58, 0
    %v82 = vsel %vm74, %v59, 0
    %v85 = vsel %vm74, %v60, 0
    %vm87 = vcmask 1043456
    %v89 = vsel %vm87, %v73, 0
    %91 = vmatprep.subr.mxu0 0.0
    %92 = vmatpush1.msra.mxu0 0.0
    %93 = vmatprep.subr.mxu0 0.0
    %94 = vmatpush1.msra.mxu0 0.0
    %95 = vmatprep.subr.mxu0 0.0
    %96 = vmatpush1.msra.mxu0 0.0
    %97 = vmatprep.subr.mxu0 0.0
    %98 = vmatpush1.msra.mxu0 %v89
    %99 = vmatprep.subr.mxu0 0.0
    %100 = vmatpush1.msra.mxu0 %v72
    %101 = vmatprep.subr.mxu0 0.0
    %102 = vmatpush1.msra.mxu0 %v71
    %103 = vmatprep.subr.mxu0 0.0
    %104 = vmatpush1.msra.mxu0 %v70
    %105 = vmatprep.subr.mxu0 0.0
    %106 = vmatpush1.msra.mxu0 %v69
    %107 = vmatprep.subr.mxu0 0.0
    %108 = vmatpush1.msra.mxu0 %v68
    %109 = vmatprep.subr.mxu0 0.0
    %110 = vmatpush1.msra.mxu0 %v67
    %111 = vmatprep.subr.mxu0 0.0
    %112 = vmatpush1.msra.mxu0 %v66
    %113 = vmatprep.subr.mxu0 0.0
    %114 = vmatpush1.msra.mxu0 %v65
    %115 = vmatprep.subr.mxu0 0.0
    %116 = vmatpush1.msra.mxu0 %v64
    %117 = vmatprep.subr.mxu0 0.0
    %118 = vmatpush1.msra.mxu0 %v63
    %119 = vmatprep.subr.mxu0 0.0
    %120 = vmatpush1.msra.mxu0 %v62
    %121 = vmatprep.subr.mxu0 0.0
    %122 = vmatpush1.msra.mxu0 %v61
    %123 = vmatprep.subr.mxu0 0.0
    %124 = vmatpush2.msra.mxu0 0.0
    %125 = vmatprep.subr.mxu0 0.0
    %126 = vmatpush2.msra.mxu0 0.0
    %127 = vmatprep.subr.mxu0 0.0
    %128 = vmatpush2.msra.mxu0 0.0
    %129 = vmatprep.subr.mxu0 0.0
    %130 = vmatpush2.msra.mxu0 0.0
    %131 = vmatprep.subr.mxu0 0.0
    %132 = vmatpush2.msra.mxu0 0.0
    %133 = vmatprep.subr.mxu0 0.0
    %134 = vmatpush2.msra.mxu0 0.0
    %135 = vmatprep.subr.mxu0 0.0
    %136 = vmatpush2.msra.mxu0 0.0
    %137 = vmatprep.subr.mxu0 0.0
    %138 = vmatpush2.msra.mxu0 0.0
    %139 = vmatprep.subr.mxu0 0.0
    %140 = vmatpush2.msra.mxu0 0.0
    %141 = vmatprep.subr.mxu0 0.0
    %142 = vmatpush2.msra.mxu0 0.0
    %143 = vmatprep.subr.mxu0 0.0
    %144 = vmatpush2.msra.mxu0 0.0
    %145 = vmatprep.subr.mxu0 0.0
    %146 = vmatpush2.msra.mxu0 0.0
    %147 = vmatprep.subr.mxu0 0.0
    %148 = vmatpush2.msra.mxu0 0.0
    %149 = vmatprep.subr.mxu0 0.0
    %150 = vmatpush2.msra.mxu0 0.0
    %151 = vmatprep.subr.mxu0 0.0
    %152 = vmatpush2.msra.mxu0 0.0
    %153 = vmatprep.subr.mxu0 0.0
    %154 = vmatpush2.msra.mxu0 0.0
    %155 = vmatprep.mubr.f32.mxu0 0.0
    %156 = vmatmul.mubr.f32.gmra.mxu0 %v76
    %v157 = vpop.f32.mrf.mxu0
    %v158 = vadd.f32 0.0, %v157
    %v159 = vpop.f32.mrf.mxu0
    %160 = vmatprep.mubr.f32.mxu0 0.0
    %161 = vmatmul.mubr.f32.gmra.mxu0 %v79
    %v162 = vpop.f32.mrf.mxu0
    %v163 = vadd.f32 0.0, %v162
    %v164 = vpop.f32.mrf.mxu0
    %165 = vmatprep.mubr.f32.mxu0 0.0
    %166 = vmatmul.mubr.f32.gmra.mxu0 %v82
    %v167 = vpop.f32.mrf.mxu0
    %v168 = vadd.f32 0.0, %v167
    %v169 = vpop.f32.mrf.mxu0
    %170 = vmatprep.mubr.f32.mxu0 0.0
    %171 = vmatmul.mubr.f32.gmra.mxu0 %v85
    %v172 = vpop.f32.mrf.mxu0
    %v173 = vadd.f32 0.0, %v172
    %v174 = vpop.f32.mrf.mxu0
    %175 = vdwg.mxu0
    %vm176 = vcmask 261120
    %177 = vst.msk [vmem:[#allocation2] sm:$0xff] %vm176, %v158
    %178 = vst.msk [vmem:[#allocation2 + $0x8] sm:$0xff] %vm176, %v163
    %179 = vst.msk [vmem:[#allocation2 + $0x10] sm:$0xff] %vm176, %v168
    %180 = vst.msk [vmem:[#allocation2 + $0x18] sm:$0xff] %vm176, %v173
    %181 = vst.msk [vmem:[#allocation2 + $0x20] sm:$0xff] %vm176, 0.0
    %v182 = vld [vmem:[#allocation3] sm:$0xff]
    %v183 = vld [vmem:[#allocation3 + $0x8] sm:$0xff]
    %v184 = vld [vmem:[#allocation3 + $0x10] sm:$0xff]
    %v185 = vld [vmem:[#allocation3 + $0x18] sm:$0xff]
    %v186 = vld [vmem:[#allocation2 + $0x1] sm:$0xff]
    %v187 = vld [vmem:[#allocation2 + $0x9] sm:$0xff]
    %v188 = vld [vmem:[#allocation2 + $0x11] sm:$0xff]
    %v189 = vld [vmem:[#allocation2 + $0x19] sm:$0xff]
    %v190 = vld [vmem:[#allocation3 + $0x20] sm:$0xff]
    %v191 = vld [vmem:[#allocation3 + $0x28] sm:$0xff]
    %v192 = vld [vmem:[#allocation3 + $0x30] sm:$0xff]
    %v193 = vld [vmem:[#allocation3 + $0x38] sm:$0xff]
    %v195 = vsel %vm176, %v186, 0
    %v198 = vsel %vm176, %v187, 0
    %v201 = vsel %vm176, %v188, 0
    %v204 = vsel %vm176, %v189, 0
    %206 = vmatprep.subr.mxu0 0.0
    %207 = vmatpush1.msra.mxu0 0.0
    %208 = vmatprep.subr.mxu0 0.0
    %209 = vmatpush1.msra.mxu0 0.0
    %210 = vmatprep.subr.mxu0 0.0
    %211 = vmatpush1.msra.mxu0 0.0
    %212 = vmatprep.subr.mxu0 0.0
    %213 = vmatpush1.msra.mxu0 0.0
    %214 = vmatprep.subr.mxu0 0.0
    %215 = vmatpush1.msra.mxu0 0.0
    %216 = vmatprep.subr.mxu0 0.0
    %217 = vmatpush1.msra.mxu0 0.0
    %218 = vmatprep.subr.mxu0 0.0
    %219 = vmatpush1.msra.mxu0 0.0
    %220 = vmatprep.subr.mxu0 0.0
    %221 = vmatpush1.msra.mxu0 0.0
    %222 = vmatprep.subr.mxu0 0.0
    %223 = vmatpush1.msra.mxu0 0.0
    %224 = vmatprep.subr.mxu0 0.0
    %225 = vmatpush1.msra.mxu0 0.0
    %226 = vmatprep.subr.mxu0 0.0
    %227 = vmatpush1.msra.mxu0 0.0
    %228 = vmatprep.subr.mxu0 0.0
    %229 = vmatpush1.msra.mxu0 0.0
    %230 = vmatprep.subr.mxu0 0.0
    %231 = vmatpush1.msra.mxu0 %v193
    %232 = vmatprep.subr.mxu0 0.0
    %233 = vmatpush1.msra.mxu0 %v192
    %234 = vmatprep.subr.mxu0 0.0
    %235 = vmatpush1.msra.mxu0 %v191
    %236 = vmatprep.subr.mxu0 0.0
    %237 = vmatpush1.msra.mxu0 %v190
    %238 = vmatprep.subr.mxu0 0.0
    %239 = vmatpush2.msra.mxu0 0.0
    %240 = vmatprep.subr.mxu0 0.0
    %241 = vmatpush2.msra.mxu0 0.0
    %242 = vmatprep.subr.mxu0 0.0
    %243 = vmatpush2.msra.mxu0 0.0
    %244 = vmatprep.subr.mxu0 0.0
    %245 = vmatpush2.msra.mxu0 0.0
    %246 = vmatprep.subr.mxu0 0.0
    %247 = vmatpush2.msra.mxu0 0.0
    %248 = vmatprep.subr.mxu0 0.0
    %249 = vmatpush2.msra.mxu0 0.0
    %250 = vmatprep.subr.mxu0 0.0
    %251 = vmatpush2.msra.mxu0 0.0
    %252 = vmatprep.subr.mxu0 0.0
    %253 = vmatpush2.msra.mxu0 0.0
    %254 = vmatprep.subr.mxu0 0.0
    %255 = vmatpush2.msra.mxu0 0.0
    %256 = vmatprep.subr.mxu0 0.0
    %257 = vmatpush2.msra.mxu0 0.0
    %258 = vmatprep.subr.mxu0 0.0
    %259 = vmatpush2.msra.mxu0 0.0
    %260 = vmatprep.subr.mxu0 0.0
    %261 = vmatpush2.msra.mxu0 0.0
    %262 = vmatprep.subr.mxu0 0.0
    %263 = vmatpush2.msra.mxu0 0.0
    %264 = vmatprep.subr.mxu0 0.0
    %265 = vmatpush2.msra.mxu0 0.0
    %266 = vmatprep.subr.mxu0 0.0
    %267 = vmatpush2.msra.mxu0 0.0
    %268 = vmatprep.subr.mxu0 0.0
    %269 = vmatpush2.msra.mxu0 0.0
    %270 = vmatprep.mubr.f32.mxu0 0.0
    %271 = vmatmul.mubr.f32.gmra.mxu0 %v195
    %v272 = vpop.f32.mrf.mxu0
    %v273 = vadd.f32 0.0, %v272
    %v274 = vpop.f32.mrf.mxu0
    %275 = vmatprep.mubr.f32.mxu0 0.0
    %276 = vmatmul.mubr.f32.gmra.mxu0 %v198
    %v277 = vpop.f32.mrf.mxu0
    %v278 = vadd.f32 0.0, %v277
    %v279 = vpop.f32.mrf.mxu0
    %280 = vmatprep.mubr.f32.mxu0 0.0
    %281 = vmatmul.mubr.f32.gmra.mxu0 %v201
    %v282 = vpop.f32.mrf.mxu0
    %v283 = vadd.f32 0.0, %v282
    %v284 = vpop.f32.mrf.mxu0
    %285 = vmatprep.mubr.f32.mxu0 0.0
    %286 = vmatmul.mubr.f32.gmra.mxu0 %v204
    %v287 = vpop.f32.mrf.mxu0
    %v288 = vadd.f32 0.0, %v287
    %v289 = vpop.f32.mrf.mxu0
    %290 = vdwg.mxu0
    %v292 = vsel %vm176, %v158, 0
    %v295 = vsel %vm176, %v163, 0
    %v298 = vsel %vm176, %v168, 0
    %v301 = vsel %vm176, %v173, 0
    %303 = vmatprep.subr.mxu0 0.0
    %304 = vmatpush1.msra.mxu0 0.0
    %305 = vmatprep.subr.mxu0 0.0
    %306 = vmatpush1.msra.mxu0 0.0
    %307 = vmatprep.subr.mxu0 0.0
    %308 = vmatpush1.msra.mxu0 0.0
    %309 = vmatprep.subr.mxu0 0.0
    %310 = vmatpush1.msra.mxu0 0.0
    %311 = vmatprep.subr.mxu0 0.0
    %312 = vmatpush1.msra.mxu0 0.0
    %313 = vmatprep.subr.mxu0 0.0
    %314 = vmatpush1.msra.mxu0 0.0
    %315 = vmatprep.subr.mxu0 0.0
    %316 = vmatpush1.msra.mxu0 0.0
    %317 = vmatprep.subr.mxu0 0.0
    %318 = vmatpush1.msra.mxu0 0.0
    %319 = vmatprep.subr.mxu0 0.0
    %320 = vmatpush1.msra.mxu0 0.0
    %321 = vmatprep.subr.mxu0 0.0
    %322 = vmatpush1.msra.mxu0 0.0
    %323 = vmatprep.subr.mxu0 0.0
    %324 = vmatpush1.msra.mxu0 0.0
    %325 = vmatprep.subr.mxu0 0.0
    %326 = vmatpush1.msra.mxu0 0.0
    %327 = vmatprep.subr.mxu0 0.0
    %328 = vmatpush1.msra.mxu0 %v185
    %329 = vmatprep.subr.mxu0 0.0
    %330 = vmatpush1.msra.mxu0 %v184
    %331 = vmatprep.subr.mxu0 0.0
    %332 = vmatpush1.msra.mxu0 %v183
    %333 = vmatprep.subr.mxu0 0.0
    %334 = vmatpush1.msra.mxu0 %v182
    %335 = vmatprep.subr.mxu0 0.0
    %336 = vmatpush2.msra.mxu0 0.0
    %337 = vmatprep.subr.mxu0 0.0
    %338 = vmatpush2.msra.mxu0 0.0
    %339 = vmatprep.subr.mxu0 0.0
    %340 = vmatpush2.msra.mxu0 0.0
    %341 = vmatprep.subr.mxu0 0.0
    %342 = vmatpush2.msra.mxu0 0.0
    %343 = vmatprep.subr.mxu0 0.0
    %344 = vmatpush2.msra.mxu0 0.0
    %345 = vmatprep.subr.mxu0 0.0
    %346 = vmatpush2.msra.mxu0 0.0
    %347 = vmatprep.subr.mxu0 0.0
    %348 = vmatpush2.msra.mxu0 0.0
    %349 = vmatprep.subr.mxu0 0.0
    %350 = vmatpush2.msra.mxu0 0.0
    %351 = vmatprep.subr.mxu0 0.0
    %352 = vmatpush2.msra.mxu0 0.0
    %353 = vmatprep.subr.mxu0 0.0
    %354 = vmatpush2.msra.mxu0 0.0
    %355 = vmatprep.subr.mxu0 0.0
    %356 = vmatpush2.msra.mxu0 0.0
    %357 = vmatprep.subr.mxu0 0.0
    %358 = vmatpush2.msra.mxu0 0.0
    %359 = vmatprep.subr.mxu0 0.0
    %360 = vmatpush2.msra.mxu0 0.0
    %361 = vmatprep.subr.mxu0 0.0
    %362 = vmatpush2.msra.mxu0 0.0
    %363 = vmatprep.subr.mxu0 0.0
    %364 = vmatpush2.msra.mxu0 0.0
    %365 = vmatprep.subr.mxu0 0.0
    %366 = vmatpush2.msra.mxu0 0.0
    %367 = vmatprep.mubr.f32.mxu0 0.0
    %368 = vmatmul.mubr.f32.gmra.mxu0 %v292
    %v369 = vpop.f32.mrf.mxu0
    %v370 = vadd.f32 %v273, %v369
    %v371 = vpop.f32.mrf.mxu0
    %372 = vmatprep.mubr.f32.mxu0 0.0
    %373 = vmatmul.mubr.f32.gmra.mxu0 %v295
    %v374 = vpop.f32.mrf.mxu0
    %v375 = vadd.f32 %v278, %v374
    %v376 = vpop.f32.mrf.mxu0
    %377 = vmatprep.mubr.f32.mxu0 0.0
    %378 = vmatmul.mubr.f32.gmra.mxu0 %v298
    %v379 = vpop.f32.mrf.mxu0
    %v380 = vadd.f32 %v283, %v379
    %v381 = vpop.f32.mrf.mxu0
    %382 = vmatprep.mubr.f32.mxu0 0.0
    %383 = vmatmul.mubr.f32.gmra.mxu0 %v301
    %v384 = vpop.f32.mrf.mxu0
    %v385 = vadd.f32 %v288, %v384
    %v386 = vpop.f32.mrf.mxu0
    %387 = vdwg.mxu0
    %v388 = vld [vmem:[#allocation2 + $0x2] sm:$0xff]
    %v389 = vld [vmem:[#allocation2 + $0xa] sm:$0xff]
    %v390 = vld [vmem:[#allocation2 + $0x12] sm:$0xff]
    %v391 = vld [vmem:[#allocation2 + $0x1a] sm:$0xff]
    %v392 = vld [vmem:[#allocation3 + $0x40] sm:$0xff]
    %v393 = vld [vmem:[#allocation3 + $0x48] sm:$0xff]
    %v394 = vld [vmem:[#allocation3 + $0x50] sm:$0xff]
    %v395 = vld [vmem:[#allocation3 + $0x58] sm:$0xff]
    %v397 = vsel %vm176, %v388, 0
    %v400 = vsel %vm176, %v389, 0
    %v403 = vsel %vm176, %v390, 0
    %v406 = vsel %vm176, %v391, 0
    %408 = vmatprep.subr.mxu0 0.0
    %409 = vmatpush1.msra.mxu0 0.0
    %410 = vmatprep.subr.mxu0 0.0
    %411 = vmatpush1.msra.mxu0 0.0
    %412 = vmatprep.subr.mxu0 0.0
    %413 = vmatpush1.msra.mxu0 0.0
    %414 = vmatprep.subr.mxu0 0.0
    %415 = vmatpush1.msra.mxu0 0.0
    %416 = vmatprep.subr.mxu0 0.0
    %417 = vmatpush1.msra.mxu0 0.0
    %418 = vmatprep.subr.mxu0 0.0
    %419 = vmatpush1.msra.mxu0 0.0
    %420 = vmatprep.subr.mxu0 0.0
    %421 = vmatpush1.msra.mxu0 0.0
    %422 = vmatprep.subr.mxu0 0.0
    %423 = vmatpush1.msra.mxu0 0.0
    %424 = vmatprep.subr.mxu0 0.0
    %425 = vmatpush1.msra.mxu0 0.0
    %426 = vmatprep.subr.mxu0 0.0
    %427 = vmatpush1.msra.mxu0 0.0
    %428 = vmatprep.subr.mxu0 0.0
    %429 = vmatpush1.msra.mxu0 0.0
    %430 = vmatprep.subr.mxu0 0.0
    %431 = vmatpush1.msra.mxu0 0.0
    %432 = vmatprep.subr.mxu0 0.0
    %433 = vmatpush1.msra.mxu0 %v395
    %434 = vmatprep.subr.mxu0 0.0
    %435 = vmatpush1.msra.mxu0 %v394
    %436 = vmatprep.subr.mxu0 0.0
    %437 = vmatpush1.msra.mxu0 %v393
    %438 = vmatprep.subr.mxu0 0.0
    %439 = vmatpush1.msra.mxu0 %v392
    %440 = vmatprep.subr.mxu0 0.0
    %441 = vmatpush2.msra.mxu0 0.0
    %442 = vmatprep.subr.mxu0 0.0
    %443 = vmatpush2.msra.mxu0 0.0
    %444 = vmatprep.subr.mxu0 0.0
    %445 = vmatpush2.msra.mxu0 0.0
    %446 = vmatprep.subr.mxu0 0.0
    %447 = vmatpush2.msra.mxu0 0.0
    %448 = vmatprep.subr.mxu0 0.0
    %449 = vmatpush2.msra.mxu0 0.0
    %450 = vmatprep.subr.mxu0 0.0
    %451 = vmatpush2.msra.mxu0 0.0
    %452 = vmatprep.subr.mxu0 0.0
    %453 = vmatpush2.msra.mxu0 0.0
    %454 = vmatprep.subr.mxu0 0.0
    %455 = vmatpush2.msra.mxu0 0.0
    %456 = vmatprep.subr.mxu0 0.0
    %457 = vmatpush2.msra.mxu0 0.0
    %458 = vmatprep.subr.mxu0 0.0
    %459 = vmatpush2.msra.mxu0 0.0
    %460 = vmatprep.subr.mxu0 0.0
    %461 = vmatpush2.msra.mxu0 0.0
    %462 = vmatprep.subr.mxu0 0.0
    %463 = vmatpush2.msra.mxu0 0.0
    %464 = vmatprep.subr.mxu0 0.0
    %465 = vmatpush2.msra.mxu0 0.0
    %466 = vmatprep.subr.mxu0 0.0
    %467 = vmatpush2.msra.mxu0 0.0
    %468 = vmatprep.subr.mxu0 0.0
    %469 = vmatpush2.msra.mxu0 0.0
    %470 = vmatprep.subr.mxu0 0.0
    %471 = vmatpush2.msra.mxu0 0.0
    %472 = vmatprep.mubr.f32.mxu0 0.0
    %473 = vmatmul.mubr.f32.gmra.mxu0 %v397
    %v474 = vpop.f32.mrf.mxu0
    %v475 = vadd.f32 0.0, %v474
    %v476 = vpop.f32.mrf.mxu0
    %477 = vmatprep.mubr.f32.mxu0 0.0
    %478 = vmatmul.mubr.f32.gmra.mxu0 %v400
    %v479 = vpop.f32.mrf.mxu0
    %v480 = vadd.f32 0.0, %v479
    %v481 = vpop.f32.mrf.mxu0
    %482 = vmatprep.mubr.f32.mxu0 0.0
    %483 = vmatmul.mubr.f32.gmra.mxu0 %v403
    %v484 = vpop.f32.mrf.mxu0
    %v485 = vadd.f32 0.0, %v484
    %v486 = vpop.f32.mrf.mxu0
    %487 = vmatprep.mubr.f32.mxu0 0.0
    %488 = vmatmul.mubr.f32.gmra.mxu0 %v406
    %v489 = vpop.f32.mrf.mxu0
    %v490 = vadd.f32 0.0, %v489
    %v491 = vpop.f32.mrf.mxu0
    %492 = vdwg.mxu0
    %v493 = vadd.f32 %v370, %v475
    %v494 = vadd.f32 %v375, %v480
    %v495 = vadd.f32 %v380, %v485
    %v496 = vadd.f32 %v385, %v490
    %v497 = vld [vmem:[#allocation2 + $0x3] sm:$0xff]
    %v498 = vld [vmem:[#allocation2 + $0xb] sm:$0xff]
    %v499 = vld [vmem:[#allocation2 + $0x13] sm:$0xff]
    %v500 = vld [vmem:[#allocation2 + $0x1b] sm:$0xff]
    %v501 = vld [vmem:[#allocation3 + $0x60] sm:$0xff]
    %v502 = vld [vmem:[#allocation3 + $0x68] sm:$0xff]
    %v503 = vld [vmem:[#allocation3 + $0x70] sm:$0xff]
    %v504 = vld [vmem:[#allocation3 + $0x78] sm:$0xff]
    %v506 = vsel %vm176, %v497, 0
    %v509 = vsel %vm176, %v498, 0
    %v512 = vsel %vm176, %v499, 0
    %v515 = vsel %vm176, %v500, 0
    %517 = vmatprep.subr.mxu0 0.0
    %518 = vmatpush1.msra.mxu0 0.0
    %519 = vmatprep.subr.mxu0 0.0
    %520 = vmatpush1.msra.mxu0 0.0
    %521 = vmatprep.subr.mxu0 0.0
    %522 = vmatpush1.msra.mxu0 0.0
    %523 = vmatprep.subr.mxu0 0.0
    %524 = vmatpush1.msra.mxu0 0.0
    %525 = vmatprep.subr.mxu0 0.0
    %526 = vmatpush1.msra.mxu0 0.0
    %527 = vmatprep.subr.mxu0 0.0
    %528 = vmatpush1.msra.mxu0 0.0
    %529 = vmatprep.subr.mxu0 0.0
    %530 = vmatpush1.msra.mxu0 0.0
    %531 = vmatprep.subr.mxu0 0.0
    %532 = vmatpush1.msra.mxu0 0.0
    %533 = vmatprep.subr.mxu0 0.0
    %534 = vmatpush1.msra.mxu0 0.0
    %535 = vmatprep.subr.mxu0 0.0
    %536 = vmatpush1.msra.mxu0 0.0
    %537 = vmatprep.subr.mxu0 0.0
    %538 = vmatpush1.msra.mxu0 0.0
    %539 = vmatprep.subr.mxu0 0.0
    %540 = vmatpush1.msra.mxu0 0.0
    %541 = vmatprep.subr.mxu0 0.0
    %542 = vmatpush1.msra.mxu0 %v504
    %543 = vmatprep.subr.mxu0 0.0
    %544 = vmatpush1.msra.mxu0 %v503
    %545 = vmatprep.subr.mxu0 0.0
    %546 = vmatpush1.msra.mxu0 %v502
    %547 = vmatprep.subr.mxu0 0.0
    %548 = vmatpush1.msra.mxu0 %v501
    %549 = vmatprep.subr.mxu0 0.0
    %550 = vmatpush2.msra.mxu0 0.0
    %551 = vmatprep.subr.mxu0 0.0
    %552 = vmatpush2.msra.mxu0 0.0
    %553 = vmatprep.subr.mxu0 0.0
    %554 = vmatpush2.msra.mxu0 0.0
    %555 = vmatprep.subr.mxu0 0.0
    %556 = vmatpush2.msra.mxu0 0.0
    %557 = vmatprep.subr.mxu0 0.0
    %558 = vmatpush2.msra.mxu0 0.0
    %559 = vmatprep.subr.mxu0 0.0
    %560 = vmatpush2.msra.mxu0 0.0
    %561 = vmatprep.subr.mxu0 0.0
    %562 = vmatpush2.msra.mxu0 0.0
    %563 = vmatprep.subr.mxu0 0.0
    %564 = vmatpush2.msra.mxu0 0.0
    %565 = vmatprep.subr.mxu0 0.0
    %566 = vmatpush2.msra.mxu0 0.0
    %567 = vmatprep.subr.mxu0 0.0
    %568 = vmatpush2.msra.mxu0 0.0
    %569 = vmatprep.subr.mxu0 0.0
    %570 = vmatpush2.msra.mxu0 0.0
    %571 = vmatprep.subr.mxu0 0.0
    %572 = vmatpush2.msra.mxu0 0.0
    %573 = vmatprep.subr.mxu0 0.0
    %574 = vmatpush2.msra.mxu0 0.0
    %575 = vmatprep.subr.mxu0 0.0
    %576 = vmatpush2.msra.mxu0 0.0
    %577 = vmatprep.subr.mxu0 0.0
    %578 = vmatpush2.msra.mxu0 0.0
    %579 = vmatprep.subr.mxu0 0.0
    %580 = vmatpush2.msra.mxu0 0.0
    %581 = vmatprep.mubr.f32.mxu0 0.0
    %582 = vmatmul.mubr.f32.gmra.mxu0 %v506
    %v583 = vpop.f32.mrf.mxu0
    %v584 = vadd.f32 0.0, %v583
    %v585 = vpop.f32.mrf.mxu0
    %586 = vmatprep.mubr.f32.mxu0 0.0
    %587 = vmatmul.mubr.f32.gmra.mxu0 %v509
    %v588 = vpop.f32.mrf.mxu0
    %v589 = vadd.f32 0.0, %v588
    %v590 = vpop.f32.mrf.mxu0
    %591 = vmatprep.mubr.f32.mxu0 0.0
    %592 = vmatmul.mubr.f32.gmra.mxu0 %v512
    %v593 = vpop.f32.mrf.mxu0
    %v594 = vadd.f32 0.0, %v593
    %v595 = vpop.f32.mrf.mxu0
    %596 = vmatprep.mubr.f32.mxu0 0.0
    %597 = vmatmul.mubr.f32.gmra.mxu0 %v515
    %v598 = vpop.f32.mrf.mxu0
    %v599 = vadd.f32 0.0, %v598
    %v600 = vpop.f32.mrf.mxu0
    %601 = vdwg.mxu0
    %v602 = vadd.f32 %v493, %v584
    %v603 = vadd.f32 %v494, %v589
    %v604 = vadd.f32 %v495, %v594
    %v605 = vadd.f32 %v496, %v599
    %v606 = vld [vmem:[#allocation2 + $0x4] sm:$0xff]
    %v607 = vld [vmem:[#allocation2 + $0xc] sm:$0xff]
    %v608 = vld [vmem:[#allocation2 + $0x14] sm:$0xff]
    %v609 = vld [vmem:[#allocation2 + $0x1c] sm:$0xff]
    %v610 = vld [vmem:[#allocation3 + $0x80] sm:$0xff]
    %v611 = vld [vmem:[#allocation3 + $0x88] sm:$0xff]
    %v612 = vld [vmem:[#allocation3 + $0x90] sm:$0xff]
    %v613 = vld [vmem:[#allocation3 + $0x98] sm:$0xff]
    %v615 = vsel %vm176, %v606, 0
    %v618 = vsel %vm176, %v607, 0
    %v621 = vsel %vm176, %v608, 0
    %v624 = vsel %vm176, %v609, 0
    %626 = vmatprep.subr.mxu0 0.0
    %627 = vmatpush1.msra.mxu0 0.0
    %628 = vmatprep.subr.mxu0 0.0
    %629 = vmatpush1.msra.mxu0 0.0
    %630 = vmatprep.subr.mxu0 0.0
    %631 = vmatpush1.msra.mxu0 0.0
    %632 = vmatprep.subr.mxu0 0.0
    %633 = vmatpush1.msra.mxu0 0.0
    %634 = vmatprep.subr.mxu0 0.0
    %635 = vmatpush1.msra.mxu0 0.0
    %636 = vmatprep.subr.mxu0 0.0
    %637 = vmatpush1.msra.mxu0 0.0
    %638 = vmatprep.subr.mxu0 0.0
    %639 = vmatpush1.msra.mxu0 0.0
    %640 = vmatprep.subr.mxu0 0.0
    %641 = vmatpush1.msra.mxu0 0.0
    %642 = vmatprep.subr.mxu0 0.0
    %643 = vmatpush1.msra.mxu0 0.0
    %644 = vmatprep.subr.mxu0 0.0
    %645 = vmatpush1.msra.mxu0 0.0
    %646 = vmatprep.subr.mxu0 0.0
    %647 = vmatpush1.msra.mxu0 0.0
    %648 = vmatprep.subr.mxu0 0.0
    %649 = vmatpush1.msra.mxu0 0.0
    %650 = vmatprep.subr.mxu0 0.0
    %651 = vmatpush1.msra.mxu0 %v613
    %652 = vmatprep.subr.mxu0 0.0
    %653 = vmatpush1.msra.mxu0 %v612
    %654 = vmatprep.subr.mxu0 0.0
    %655 = vmatpush1.msra.mxu0 %v611
    %656 = vmatprep.subr.mxu0 0.0
    %657 = vmatpush1.msra.mxu0 %v610
    %658 = vmatprep.subr.mxu0 0.0
    %659 = vmatpush2.msra.mxu0 0.0
    %660 = vmatprep.subr.mxu0 0.0
    %661 = vmatpush2.msra.mxu0 0.0
    %662 = vmatprep.subr.mxu0 0.0
    %663 = vmatpush2.msra.mxu0 0.0
    %664 = vmatprep.subr.mxu0 0.0
    %665 = vmatpush2.msra.mxu0 0.0
    %666 = vmatprep.subr.mxu0 0.0
    %667 = vmatpush2.msra.mxu0 0.0
    %668 = vmatprep.subr.mxu0 0.0
    %669 = vmatpush2.msra.mxu0 0.0
    %670 = vmatprep.subr.mxu0 0.0
    %671 = vmatpush2.msra.mxu0 0.0
    %672 = vmatprep.subr.mxu0 0.0
    %673 = vmatpush2.msra.mxu0 0.0
    %674 = vmatprep.subr.mxu0 0.0
    %675 = vmatpush2.msra.mxu0 0.0
    %676 = vmatprep.subr.mxu0 0.0
    %677 = vmatpush2.msra.mxu0 0.0
    %678 = vmatprep.subr.mxu0 0.0
    %679 = vmatpush2.msra.mxu0 0.0
    %680 = vmatprep.subr.mxu0 0.0
    %681 = vmatpush2.msra.mxu0 0.0
    %682 = vmatprep.subr.mxu0 0.0
    %683 = vmatpush2.msra.mxu0 0.0
    %684 = vmatprep.subr.mxu0 0.0
    %685 = vmatpush2.msra.mxu0 0.0
    %686 = vmatprep.subr.mxu0 0.0
    %687 = vmatpush2.msra.mxu0 0.0
    %688 = vmatprep.subr.mxu0 0.0
    %689 = vmatpush2.msra.mxu0 0.0
    %690 = vmatprep.mubr.f32.mxu0 0.0
    %691 = vmatmul.mubr.f32.gmra.mxu0 %v615
    %v692 = vpop.f32.mrf.mxu0
    %v693 = vadd.f32 0.0, %v692
    %v694 = vpop.f32.mrf.mxu0
    %695 = vmatprep.mubr.f32.mxu0 0.0
    %696 = vmatmul.mubr.f32.gmra.mxu0 %v618
    %v697 = vpop.f32.mrf.mxu0
    %v698 = vadd.f32 0.0, %v697
    %v699 = vpop.f32.mrf.mxu0
    %700 = vmatprep.mubr.f32.mxu0 0.0
    %701 = vmatmul.mubr.f32.gmra.mxu0 %v621
    %v702 = vpop.f32.mrf.mxu0
    %v703 = vadd.f32 0.0, %v702
    %v704 = vpop.f32.mrf.mxu0
    %705 = vmatprep.mubr.f32.mxu0 0.0
    %706 = vmatmul.mubr.f32.gmra.mxu0 %v624
    %v707 = vpop.f32.mrf.mxu0
    %v708 = vadd.f32 0.0, %v707
    %v709 = vpop.f32.mrf.mxu0
    %710 = vdwg.mxu0
    %v711 = vadd.f32 %v602, %v693
    %v712 = vadd.f32 %v603, %v698
    %v713 = vadd.f32 %v604, %v703
    %v714 = vadd.f32 %v605, %v708
    %v715 = vld [vmem:[#allocation3 + $0xa0] sm:$0x1]
    %v716 = vld [vmem:[#allocation3 + $0xa8] sm:$0xff]
    %v717 = vld [vmem:[#allocation3 + $0xb0] sm:$0xff]
    %v718 = vld [vmem:[#allocation3 + $0xb8] sm:$0xff]
    %v719 = vld [vmem:[#allocation3 + $0xc0] sm:$0xff]
    %v720 = vlaneseq
    %v721 = vshrl.u32 %v720, 7
    %v722 = vsub.s32 0, %v721
    %v723 = vrot.slane %v715, %v722
    %v724 = vadd.f32 %v711, %v723
    %v725 = vadd.f32 %v712, %v723
    %v726 = vadd.f32 %v713, %v723
    %v727 = vadd.f32 %v714, %v723
    %v728 = vmax.f32 %v724, 0.0
    %v729 = vmax.f32 %v725, 0.0
    %v730 = vmax.f32 %v726, 0.0
    %v731 = vmax.f32 %v727, 0.0
    %v732 = vmul.f32 %v728, %v716
    %v733 = vmul.f32 %v729, %v717
    %v734 = vmul.f32 %v730, %v718
    %v735 = vmul.f32 %v731, %v719
    %v736 = vmax.f32 %v732, %v733
    %v737 = vrot.slane %v736, 4
    %v738 = vmax.f32 %v736, %v737
    %v739 = vrot.slane %v738, 2
    %v740 = vmax.f32 %v738, %v739
    %v741 = vrot.slane %v740, 1
    %v742 = vmax.f32 %v740, %v741
    %v743 = vmax.f32 %v734, %v735
    %v744 = vrot.slane %v743, 4
    %v745 = vmax.f32 %v743, %v744
    %v746 = vrot.slane %v745, 2
    %v747 = vmax.f32 %v745, %v746
    %v748 = vrot.slane %v747, 1
    %v749 = vmax.f32 %v747, %v748
    %vm750 = vcmask 1040384
    %v751 = vsel %vm750, %v742, %v749
    %vm752 = vcmp.eq.s32.totalorder %v36, 24
    %v753 = vsel %vm752, 1.0, %v751
    %v754 = vld [vmem:[%s3] sm:$0xff]
    %755 = vmatprep.subr.mxu0 0.0
    %756 = vmatpush1.xpose.msra.mxu0 0.0
    %757 = vmatprep.subr.mxu0 0.0
    %758 = vmatpush1.xpose.msra.mxu0 0.0
    %759 = vmatprep.subr.mxu0 0.0
    %760 = vmatpush1.xpose.msra.mxu0 0.0
    %761 = vmatprep.subr.mxu0 0.0
    %762 = vmatpush1.xpose.msra.mxu0 0.0
    %763 = vmatprep.subr.mxu0 0.0
    %764 = vmatpush1.xpose.msra.mxu0 0.0
    %765 = vmatprep.subr.mxu0 0.0
    %766 = vmatpush1.xpose.msra.mxu0 0.0
    %767 = vmatprep.subr.mxu0 0.0
    %768 = vmatpush1.xpose.msra.mxu0 0.0
    %769 = vmatprep.subr.mxu0 0.0
    %770 = vmatpush1.xpose.msra.mxu0 0.0
    %771 = vmatprep.subr.mxu0 0.0
    %772 = vmatpush1.xpose.msra.mxu0 0.0
    %773 = vmatprep.subr.mxu0 0.0
    %774 = vmatpush1.xpose.msra.mxu0 0.0
    %775 = vmatprep.subr.mxu0 0.0
    %776 = vmatpush1.xpose.msra.mxu0 0.0
    %777 = vmatprep.subr.mxu0 0.0
    %778 = vmatpush1.xpose.msra.mxu0 0.0
    %779 = vmatprep.subr.mxu0 0.0
    %780 = vmatpush1.xpose.msra.mxu0 0.0
    %781 = vmatprep.subr.mxu0 0.0
    %782 = vmatpush1.xpose.msra.mxu0 0.0
    %783 = vmatprep.subr.mxu0 0.0
    %784 = vmatpush1.xpose.msra.mxu0 0.0
    %785 = vmatprep.subr.mxu0 0.0
    %786 = vmatpush1.xpose.msra.mxu0 %v754
    %787 = vmatprep.subr.mxu0 0.0
    %788 = vmatpush2.xpose.msra.mxu0 0.0
    %789 = vmatprep.subr.mxu0 0.0
    %790 = vmatpush2.xpose.msra.mxu0 0.0
    %791 = vmatprep.subr.mxu0 0.0
    %792 = vmatpush2.xpose.msra.mxu0 0.0
    %793 = vmatprep.subr.mxu0 0.0
    %794 = vmatpush2.xpose.msra.mxu0 0.0
    %795 = vmatprep.subr.mxu0 0.0
    %796 = vmatpush2.xpose.msra.mxu0 0.0
    %797 = vmatprep.subr.mxu0 0.0
    %798 = vmatpush2.xpose.msra.mxu0 0.0
    %799 = vmatprep.subr.mxu0 0.0
    %800 = vmatpush2.xpose.msra.mxu0 0.0
    %801 = vmatprep.subr.mxu0 0.0
    %802 = vmatpush2.xpose.msra.mxu0 0.0
    %803 = vmatprep.subr.mxu0 0.0
    %804 = vmatpush2.xpose.msra.mxu0 0.0
    %805 = vmatprep.subr.mxu0 0.0
    %806 = vmatpush2.xpose.msra.mxu0 0.0
    %807 = vmatprep.subr.mxu0 0.0
    %808 = vmatpush2.xpose.msra.mxu0 0.0
    %809 = vmatprep.subr.mxu0 0.0
    %810 = vmatpush2.xpose.msra.mxu0 0.0
    %811 = vmatprep.subr.mxu0 0.0
    %812 = vmatpush2.xpose.msra.mxu0 0.0
    %813 = vmatprep.subr.mxu0 0.0
    %814 = vmatpush2.xpose.msra.mxu0 0.0
    %815 = vmatprep.subr.mxu0 0.0
    %816 = vmatpush2.xpose.msra.mxu0 0.0
    %817 = vmatprep.subr.mxu0 0.0
    %818 = vmatpush2.xpose.msra.mxu0 0.0
    %819 = vmatprep.mubr.f32.mxu0 0.0
    %820 = vmatmul.mubr.f32.gmra.mxu0 %v753
    %v821 = vpop.f32.mrf.mxu0
    %v822 = vadd.f32 0.0, %v821
    %v823 = vpop.f32.mrf.mxu0
    %824 = vdwg.mxu0
    %825 = vst [vmem:[%s4] sm:$0xff] 0.0
    %vm826 = vcmask 58368
    %827 = vst.msk [vmem:[%s4] sm:$0x3] %vm826, %v822
    // Predicated region
    $region22: #{cnn_n_forward.1} parent=1 // pred_check
      _
    $region23: #{cnn_n_forward.1} parent=1 // pred_check_branch
      %829 = sbr.rel (0) target = $region25
    $region24: #{cnn_n_forward.1} parent=1 // pred_region
      _
    $region25: #{cnn_n_forward.1} parent=1 // pred_fallthru
      _
    // Predicated region
    $region26: #{cnn_n_forward.1} parent=1 // pred_check
      _
    $region27: #{cnn_n_forward.1} parent=1 // pred_check_branch
      %831 = sbr.rel (0) target = $region29
    $region28: #{cnn_n_forward.1} parent=1 // pred_region
      _
    $region29: #{cnn_n_forward.1} parent=1 // pred_fallthru
      _
    %832 = vsyncpa [#allocation4], 1

</llo_original>
